<compile_context>
chip_gen: v7x
topology: tpu7x:2x2x1
jax: 0.10.0
libtpu: 0.0.40
codegen_flags: <defaults>
</compile_context>

<pallas_src>
import functools

import numpy as np
import jax
import jax.numpy as jnp
from jax.experimental import pallas as pl
from jax.experimental.pallas import tpu as pltpu


def _round_up(x, m):
    return ((x + m - 1) // m) * m


def _psd_band_kernel(x_ref, basis_ref, out_ref, acc_ref):
    # x_ref:     (1, TNp)     bf16  centered, zero-padded signal tile
    # basis_ref: (TNp, 2*TK)  bf16  [cos | -sin] columns for this (freq, Np) tile
    # out_ref:   (1, TK)      f32   band PSD for this frequency tile
    # acc_ref:   (1, 2*TK)    f32   re|im accumulator across the Np axis
    k = pl.program_id(1)

    @pl.when(k == 0)
    def _():
        acc_ref[...] = jnp.zeros_like(acc_ref)

    acc_ref[...] += jnp.dot(x_ref[...], basis_ref[...],
                            preferred_element_type=jnp.float32)

    @pl.when(k == pl.num_programs(1) - 1)
    def _():
        tk = out_ref.shape[-1]
        ri = acc_ref[...]
        re = ri[:, :tk]          # static, 128-aligned lane slices
        im = ri[:, tk:]
        out_ref[...] = re * re + im * im


@functools.lru_cache(maxsize=None)
def _build_psd_fn(L, Fs, high_pass, low_pass, zero_pad):
    """Build (once per config) the cached device basis + jitted forward fn."""
    pad = int(zero_pad / 2 * L) if zero_pad > 0 else 0
    Np = L + 2 * pad

    # frequency band (mirrors torch.linspace(0, Fs/2, Np//2+1) in the module)
    K = Np // 2 + 1
    Fn = Fs / 2.0
    freqs = np.linspace(0.0, Fn, K)
    use = np.logical_and(freqs >= high_pass / 60.0, freqs <= low_pass / 60.0)
    idx = np.nonzero(use)[0]
    assert idx.size > 0, "empty frequency band"
    lo, hi = int(idx[0]), int(idx[-1]) + 1          # band is contiguous
    Kb = hi - lo

    # ---- tile sizing (biggest block that fits a conservative VMEM budget) ----
    TK = min(_round_up(Kb, 128), 512)               # lane axis, multiple of 128
    Kb_pad = _round_up(Kb, TK)
    n_freq = Kb_pad // TK

    row_bytes = 2 * TK * 2                          # bf16 bytes per basis row/tile
    budget = 4 << 20                                # double-buffered basis budget
    max_tnp = max(128, (budget // (2 * row_bytes)) // 128 * 128)
    TNp = min(_round_up(Np, 128), max_tnp)          # contraction tile, 128-mult
    Np_pad = _round_up(Np, TNp)
    n_np = Np_pad // TNp

    tile_bytes = TNp * 2 * TK * 2
    vmem_limit = int(min(32 << 20, max(8 << 20, 3 * tile_bytes)))

    # ---- band-sliced DFT basis (norm='forward' 1/Np folded in), built once ----
    # per-tile column layout: [cos tile j (TK) | -sin tile j (TK)]
    n = np.arange(Np_pad, dtype=np.float64)[:, None]                # (Np_pad, 1)
    kb = (lo + np.arange(Kb_pad, dtype=np.float64))[None, :]        # (1, Kb_pad)
    ang = 2.0 * np.pi * n * kb / Np
    keep = ((np.arange(Kb_pad)[None, :] < Kb) &
            (np.arange(Np_pad)[:, None] < Np)).astype(np.float64)   # zero pads
    cos_b = (np.cos(ang) / Np) * keep
    sin_b = (-np.sin(ang) / Np) * keep
    basis_np = np.stack(
        [cos_b.reshape(Np_pad, n_freq, TK), sin_b.reshape(Np_pad, n_freq, TK)],
        axis=2,
    ).reshape(Np_pad, n_freq * 2 * TK)
    basis = jnp.asarray(basis_np, jnp.bfloat16)     # device-resident, cached

    def fn(x, basis):
        xc = x - jnp.mean(x)
        x_row = jnp.pad(xc, (pad, pad + (Np_pad - Np))) \
                   .astype(jnp.bfloat16).reshape(1, Np_pad)
        out = pl.pallas_call(
            _psd_band_kernel,
            out_shape=jax.ShapeDtypeStruct((1, Kb_pad), jnp.float32),
            grid_spec=pltpu.PrefetchScalarGridSpec(
                num_scalar_prefetch=0,
                grid=(n_freq, n_np),                 # freq outer, Np reduction inner
                in_specs=[
                    pl.BlockSpec((1, TNp), lambda j, k: (0, k)),        # signal
                    pl.BlockSpec((TNp, 2 * TK), lambda j, k: (k, j)),   # basis
                ],
                out_specs=pl.BlockSpec((1, TK), lambda j, k: (0, j)),
                scratch_shapes=[pltpu.VMEM((1, 2 * TK), jnp.float32)],
            ),
            compiler_params=pltpu.CompilerParams(
                dimension_semantics=("parallel", "arbitrary"),
                vmem_limit_bytes=vmem_limit),
        )(x_row, basis)
        band = out[0, :Kb]
        return band / jnp.sum(band)                  # final normalization (f32)

    return jax.jit(fn), basis


def calculate_norm_psd(x, Fs, high_pass, low_pass, zero_pad=0):
    """Pallas implementation of CalculateNormPSD.forward for a 1-D signal."""
    x = jnp.asarray(x, jnp.float32)
    assert x.ndim == 1, "module semantics imply a single 1-D signal"
    fn, basis = _build_psd_fn(int(x.shape[-1]), float(Fs), float(high_pass),
                              float(low_pass), int(zero_pad))
    return fn(x, basis)


def _reference(x, Fs, high_pass, low_pass, zero_pad=0):
    """Pure numpy reference mirroring the PyTorch forward."""
    x = np.asarray(x, np.float64)
    x = x - x.mean()
    L = x.shape[-1]
    if zero_pad > 0:
        p = int(zero_pad / 2 * L)
        x = np.pad(x, (p, p))
    xf = np.fft.rfft(x) / x.shape[-1]          # norm='forward'
    psd = xf.real ** 2 + xf.imag ** 2
    Fn = Fs / 2.0
    freqs = np.linspace(0.0, Fn, psd.shape[0])
    use = np.logical_and(freqs >= high_pass / 60.0, freqs <= low_pass / 60.0)
    band = psd[use]
    return band / band.sum()


if __name__ == "__main__":
    # typical rPPG-style settings: Fs = 30 Hz, band 40-250 bpm
    Fs, high_pass, low_pass = 30.0, 40.0, 250.0
    L = 128

    key = jax.random.PRNGKey(0)
    x = jax.random.normal(key, (L,), dtype=jnp.float32)

    for zp in (0, 2):   # also exercise the zero-padded (larger Np) path
        out = jax.block_until_ready(
            calculate_norm_psd(x, Fs, high_pass, low_pass, zero_pad=zp))
        # second call hits the lru_cache'd basis + jit cache (no rebuild)
        out = jax.block_until_ready(
            calculate_norm_psd(x, Fs, high_pass, low_pass, zero_pad=zp))
        ref = _reference(np.asarray(x), Fs, high_pass, low_pass, zero_pad=zp)
        assert out.shape == ref.shape, (out.shape, ref.shape)
        # bf16 basis/signal with f32 accumulation -> ~1e-3 absolute accuracy
        np.testing.assert_allclose(np.asarray(out), ref, rtol=5e-2, atol=3e-3)
        # normalization happens in f32 in the wrapper, so the sum is exact-ish
        assert abs(float(np.asarray(out).sum()) - 1.0) < 1e-5

    print("KERNEL_OK")
</pallas_src>

<mosaic_0001>
module attributes {stable_mosaic.version = 11 : i64} {
  func.func @_psd_band_kernel(%arg0: i32, %arg1: i32, %arg2: memref<1x128xbf16, #tpu.memory_space<vmem>>, %arg3: memref<128x256xbf16, #tpu.memory_space<vmem>>, %arg4: memref<1x128xf32, #tpu.memory_space<vmem>>, %arg5: memref<1x256xf32, #tpu.memory_space<vmem>>) attributes {dimension_semantics = [#tpu.dimension_semantics<parallel>, #tpu.dimension_semantics<arbitrary>], iteration_bounds = array<i64: 1, 1>, scalar_prefetch = 0 : i64, scratch_operands = 1 : i64, tpu.core_type = #tpu.core_type<tc>, window_params = [{transform_indices = @transform_0, window_bounds = array<i64: 1, 128>}, {transform_indices = @transform_1, window_bounds = array<i64: 128, 256>}, {transform_indices = @transform_2, window_bounds = array<i64: 1, 128>}]} {
    %c0_i32 = arith.constant 0 : i32
    %0 = arith.cmpi eq, %arg1, %c0_i32 : i32
    %1 = arith.extui %0 : i1 to i32
    %c0_i32_0 = arith.constant 0 : i32
    %2 = arith.cmpi ne, %1, %c0_i32_0 : i32
    scf.if %2 {
      %cst_10 = arith.constant 0.000000e+00 : f32
      %12 = vector.broadcast %cst_10 : f32 to vector<1x256xf32>
      %c0_11 = arith.constant 0 : index
      %c0_12 = arith.constant 0 : index
      %13 = vector.load %arg5[%c0_11, %c0_12] : memref<1x256xf32, #tpu.memory_space<vmem>>, vector<1x256xf32>
      tpu.vector_store %arg5[%c0_11, %c0_12], %12 {strides = array<i32>} : memref<1x256xf32, #tpu.memory_space<vmem>>, vector<1x256xf32>,
    } else {
    }
    %c0 = arith.constant 0 : index
    %c0_1 = arith.constant 0 : index
    %3 = vector.load %arg5[%c0, %c0_1] : memref<1x256xf32, #tpu.memory_space<vmem>>, vector<1x256xf32>
    %c0_2 = arith.constant 0 : index
    %c0_3 = arith.constant 0 : index
    %4 = vector.load %arg2[%c0_2, %c0_3] : memref<1x128xbf16, #tpu.memory_space<vmem>>, vector<1x128xbf16>
    %c0_4 = arith.constant 0 : index
    %c0_5 = arith.constant 0 : index
    %5 = vector.load %arg3[%c0_4, %c0_5] : memref<128x256xbf16, #tpu.memory_space<vmem>>, vector<128x256xbf16>
    %cst = arith.constant dense<0.000000e+00> : vector<1x256xf32>
    %6 = tpu.matmul %4, %5, %cst {dimension_numbers = #tpu.dot_dimension_numbers<[1], [0], [0], [1], [0, 0, 1, 1], [], []>} : vector<1x128xbf16>, vector<128x256xbf16>, vector<1x256xf32> -> vector<1x256xf32>
    %7 = arith.addf %3, %6 : vector<1x256xf32>
    %c0_6 = arith.constant 0 : index
    %c0_7 = arith.constant 0 : index
    %8 = vector.load %arg5[%c0_6, %c0_7] : memref<1x256xf32, #tpu.memory_space<vmem>>, vector<1x256xf32>
    tpu.vector_store %arg5[%c0_6, %c0_7], %7 {strides = array<i32>} : memref<1x256xf32, #tpu.memory_space<vmem>>, vector<1x256xf32>,
    %c0_i32_8 = arith.constant 0 : i32
    %9 = arith.cmpi eq, %arg1, %c0_i32_8 : i32
    %10 = arith.extui %9 : i1 to i32
    %c0_i32_9 = arith.constant 0 : i32
    %11 = arith.cmpi ne, %10, %c0_i32_9 : i32
    scf.if %11 {
      %c0_10 = arith.constant 0 : index
      %c0_11 = arith.constant 0 : index
      %12 = vector.load %arg5[%c0_10, %c0_11] : memref<1x256xf32, #tpu.memory_space<vmem>>, vector<1x256xf32>
      %13 = vector.extract_strided_slice %12 {offsets = [0, 0], sizes = [1, 128], strides = [1, 1]} : vector<1x256xf32> to vector<1x128xf32>
      %14 = vector.extract_strided_slice %12 {offsets = [0, 128], sizes = [1, 128], strides = [1, 1]} : vector<1x256xf32> to vector<1x128xf32>
      %15 = arith.mulf %13, %13 : vector<1x128xf32>
      %16 = arith.mulf %14, %14 : vector<1x128xf32>
      %17 = arith.addf %15, %16 : vector<1x128xf32>
      %c0_12 = arith.constant 0 : index
      %c0_13 = arith.constant 0 : index
      %18 = vector.load %arg4[%c0_12, %c0_13] : memref<1x128xf32, #tpu.memory_space<vmem>>, vector<1x128xf32>
      tpu.vector_store %arg4[%c0_12, %c0_13], %17 {strides = array<i32>} : memref<1x128xf32, #tpu.memory_space<vmem>>, vector<1x128xf32>,
    } else {
    }
    return
  }
  func.func @transform_0(%arg0: i32, %arg1: i32) -> (i32, i32) {
    %c0_i32 = arith.constant 0 : i32
    %c0_i32_0 = arith.constant 0 : i32
    return %c0_i32, %arg1 : i32, i32
  }
  func.func @transform_1(%arg0: i32, %arg1: i32) -> (i32, i32) {
    %c0_i32 = arith.constant 0 : i32
    return %arg1, %arg0 : i32, i32
  }
  func.func @transform_2(%arg0: i32, %arg1: i32) -> (i32, i32) {
    %c0_i32 = arith.constant 0 : i32
    %c0_i32_0 = arith.constant 0 : i32
    return %c0_i32, %arg0 : i32, i32
  }
}

</mosaic_0001>

<llo_original>
// kernel: fn.1
$region0: #{fn.1}
  #allocation0 [shape = 'u32[]', space=smem, size = 0x4, offset = 0x4, fixed_abs, tag = 'smem constant byte address 0x4 - core index']
  #allocation1 [shape = 'u32[144,128]{1,0:T(1,128)}', space=vmem, size = 0x12000, scoped, tag = 'internal scratch']
  #allocation2 [shape = 'f32[1,256]{1,0:T(1,128)}', space=vmem, size = 0x400, scoped, tag = 'scratch operand']
  %s0 = inlined_call_operand.vmem [shape: bf16[1,128], index: 0, kind: input, shape index: {}]
  %s1 = inlined_call_operand.hbm [shape: bf16[128,256], index: 1, kind: input, shape index: {}]
  %s2 = inlined_call_operand.vmem [shape: f32[1,128], index: 2, kind: output, shape index: {}]
  %s3 = sld [smem:[#allocation0]]
  $region30: #{fn.1} parent=0
    _
  %s5 = ssub.s32 1, %s3
  %s6 = scalar_select 0, %s5, %s3
  $region1: #{fn.1} parent=0
    #allocation3 [shape = 'u8[65536]{0}', space=vmem, size = 0x10000, scoped, tag = 'input window, operand 1, single buffered']
    #allocation4 [shape = 's32[1]{0}', space=sflag, size = 0x4, scoped, tag = 'scoped memory for fn.1']
    %7 = vsyncpa [#allocation4], 0
    // Predicated region
    $region2: #{fn.1} parent=1 // pred_check
      _
    $region3: #{fn.1} parent=1 // pred_check_branch
      %9 = sbr.rel (0) target = $region5
    $region4: #{fn.1} parent=1 // pred_region
      _
    $region5: #{fn.1} parent=1 // pred_fallthru
      _
    // Predicated region
    $region6: #{fn.1} parent=1 // pred_check
      _
    $region7: #{fn.1} parent=1 // pred_check_branch
      %11 = sbr.rel (0) target = $region9
    $region8: #{fn.1} parent=1 // pred_region
      %s13 = ssub.s32 2048, 2048
      %14 = vsyncadd [#allocation4], %s13
      %s15 = sshll.u32 [#allocation3], 4
      %s16 = int_to_ptr.vmem [resolvable:$true] %s15
      %21 = dma.hbm_to_vmem [thread:$0]  %s1, 2048, %s16, [#allocation4], 128, 128, 8
    $region9: #{fn.1} parent=1 // pred_fallthru
      _
    // Predicated region
    $region10: #{fn.1} parent=1 // pred_check
      _
    $region11: #{fn.1} parent=1 // pred_check_branch
      %23 = sbr.rel (0) target = $region13
    $region12: #{fn.1} parent=1 // pred_region
      %24 = dma.done [#allocation4], 2048
    $region13: #{fn.1} parent=1 // pred_fallthru
      _
    %p26 = scmp.eq.s32.totalorder 0, 0
    // Predicated region
    $region14: #{fn.1} parent=1 // pred_check
      %p27 = pneg %p26
    $region15: #{fn.1} parent=1 // pred_check_branch
      %29 = sbr.rel (%p27) target = $region17
    $region16: #{fn.1} parent=1 // pred_region
      %v30 = vlaneseq
      %vm31 = vcmp.ge.s32.totalorder %v30, 0
      %vm32 = vcmp.lt.s32.totalorder %v30, 256
      %vm33 = vmand %vm31, %vm32
      %34 = vst.msk [vmem:[#allocation2] sm:$0x3] %vm33, 0.0
    $region17: #{fn.1} parent=1 // pred_fallthru
      _
    %v35 = vld [vmem:[#allocation2] sm:$0x3]
    %v36 = vld [vmem:[%s0] sm:$0x1]
    %v37 = vld [vmem:[#allocation3] sm:$0xff]
    %v38 = vld [vmem:[#allocation3 + $0x8] sm:$0xff]
    %v39 = vld [vmem:[#allocation3 + $0x10] sm:$0xff]
    %v40 = vld [vmem:[#allocation3 + $0x18] sm:$0xff]
    %v41 = vld [vmem:[#allocation3 + $0x20] sm:$0xff]
    %v42 = vld [vmem:[#allocation3 + $0x28] sm:$0xff]
    %v43 = vld [vmem:[#allocation3 + $0x30] sm:$0xff]
    %v44 = vld [vmem:[#allocation3 + $0x38] sm:$0xff]
    %v45 = vld [vmem:[#allocation3 + $0x40] sm:$0xff]
    %v46 = vld [vmem:[#allocation3 + $0x48] sm:$0xff]
    %v47 = vld [vmem:[#allocation3 + $0x50] sm:$0xff]
    %v48 = vld [vmem:[#allocation3 + $0x58] sm:$0xff]
    %v49 = vld [vmem:[#allocation3 + $0x60] sm:$0xff]
    %v50 = vld [vmem:[#allocation3 + $0x68] sm:$0xff]
    %v51 = vld [vmem:[#allocation3 + $0x70] sm:$0xff]
    %v52 = vld [vmem:[#allocation3 + $0x78] sm:$0xff]
    %v69 = vunpack.c.l.b16 %v37
    %v70 = vunpack.c.h.b16 %v37
    %v71 = vunpack.c.l.b16 %v38
    %v72 = vunpack.c.h.b16 %v38
    %v73 = vunpack.c.l.b16 %v39
    %v74 = vunpack.c.h.b16 %v39
    %v75 = vunpack.c.l.b16 %v40
    %v76 = vunpack.c.h.b16 %v40
    %v77 = vunpack.c.l.b16 %v41
    %v78 = vunpack.c.h.b16 %v41
    %v79 = vunpack.c.l.b16 %v42
    %v80 = vunpack.c.h.b16 %v42
    %v81 = vunpack.c.l.b16 %v43
    %v82 = vunpack.c.h.b16 %v43
    %v83 = vunpack.c.l.b16 %v44
    %v84 = vunpack.c.h.b16 %v44
    %v85 = vunpack.c.l.b16 %v45
    %v86 = vunpack.c.h.b16 %v45
    %v87 = vunpack.c.l.b16 %v46
    %v88 = vunpack.c.h.b16 %v46
    %v89 = vunpack.c.l.b16 %v47
    %v90 = vunpack.c.h.b16 %v47
    %v91 = vunpack.c.l.b16 %v48
    %v92 = vunpack.c.h.b16 %v48
    %v93 = vunpack.c.l.b16 %v49
    %v94 = vunpack.c.h.b16 %v49
    %v95 = vunpack.c.l.b16 %v50
    %v96 = vunpack.c.h.b16 %v50
    %v97 = vunpack.c.l.b16 %v51
    %v98 = vunpack.c.h.b16 %v51
    %v99 = vunpack.c.l.b16 %v52
    %v100 = vunpack.c.h.b16 %v52
    %v101 = vpack.c.b16 %v71, %v69
    %v102 = vpack.c.b16 %v72, %v70
    %v103 = vpack.c.b16 %v75, %v73
    %v104 = vpack.c.b16 %v76, %v74
    %v105 = vpack.c.b16 %v79, %v77
    %v106 = vpack.c.b16 %v80, %v78
    %v107 = vpack.c.b16 %v83, %v81
    %v108 = vpack.c.b16 %v84, %v82
    %v109 = vpack.c.b16 %v87, %v85
    %v110 = vpack.c.b16 %v88, %v86
    %v111 = vpack.c.b16 %v91, %v89
    %v112 = vpack.c.b16 %v92, %v90
    %v113 = vpack.c.b16 %v95, %v93
    %v114 = vpack.c.b16 %v96, %v94
    %v115 = vpack.c.b16 %v99, %v97
    %v116 = vpack.c.b16 %v100, %v98
    %133 = vmatprep.subr.bf16.mxu0 %v102
    %134 = vmatpush1.bf16.msra.mxu0 %v101
    %135 = vmatprep.subr.bf16.mxu0 %v104
    %136 = vmatpush1.bf16.msra.mxu0 %v103
    %137 = vmatprep.subr.bf16.mxu0 %v106
    %138 = vmatpush1.bf16.msra.mxu0 %v105
    %139 = vmatprep.subr.bf16.mxu0 %v108
    %140 = vmatpush1.bf16.msra.mxu0 %v107
    %141 = vmatprep.subr.bf16.mxu0 %v110
    %142 = vmatpush1.bf16.msra.mxu0 %v109
    %143 = vmatprep.subr.bf16.mxu0 %v112
    %144 = vmatpush1.bf16.msra.mxu0 %v111
    %145 = vmatprep.subr.bf16.mxu0 %v114
    %146 = vmatpush1.bf16.msra.mxu0 %v113
    %147 = vmatprep.subr.bf16.mxu0 %v116
    %148 = vmatpush1.bf16.msra.mxu0 %v115
    %149 = vmatprep.subr.bf16.mxu0 0
    %150 = vmatpush1.bf16.msra.mxu0 0
    %151 = vmatprep.subr.bf16.mxu0 0
    %152 = vmatpush1.bf16.msra.mxu0 0
    %153 = vmatprep.subr.bf16.mxu0 0
    %154 = vmatpush1.bf16.msra.mxu0 0
    %155 = vmatprep.subr.bf16.mxu0 0
    %156 = vmatpush1.bf16.msra.mxu0 0
    %157 = vmatprep.subr.bf16.mxu0 0
    %158 = vmatpush1.bf16.msra.mxu0 0
    %159 = vmatprep.subr.bf16.mxu0 0
    %160 = vmatpush1.bf16.msra.mxu0 0
    %161 = vmatprep.subr.bf16.mxu0 0
    %162 = vmatpush1.bf16.msra.mxu0 0
    %163 = vmatprep.subr.bf16.mxu0 0
    %164 = vmatpush1.bf16.msra.mxu0 0
    %165 = vmatprep.mubr.bf16.mxu0 0
    %166 = vmatmul.mubr.bf16.gmra.mrb[0].mxu0 %v36
    %v167 = vpop.f32.mrb[0].mxu0
    %v168 = vadd.f32 0.0, %v167
    %v169 = vpop.f32.mrb[0].mxu0
    %v170 = vadd.f32 0.0, %v169
    %v171 = vpop.f32.mrb[0].mxu0
    %v172 = vpop.f32.mrb[0].mxu0
    %173 = vdwg.mxu0
    %v176 = vcombine.low %v168, %v170
    %v178 = vunpack.c.l.s4 1966171168
    %v179 = vunpack.c.0.s8 %v178
    %v180 = vlaneseq
    %v181 = vshrl.u32 %v180, 7
    %v182 = vsub.s32 %v179, %v181
    %v183 = vrot.slane %v176, %v182
    %v185 = vunpack.c.l.s4 1966171168
    %v186 = vunpack.c.0.s8 %v185
    %v187 = vlaneseq
    %v188 = vshrl.u32 %v187, 7
    %v189 = vsub.s32 %v186, %v188
    %v190 = vrot.slane %v183, %v189
    %v192 = vadd.f32 %v35, %v190
    %v193 = vlaneseq
    %vm194 = vcmp.ge.s32.totalorder %v193, 0
    %vm195 = vcmp.lt.s32.totalorder %v193, 256
    %vm196 = vmand %vm194, %vm195
    %197 = vst.msk [vmem:[#allocation2] sm:$0x3] %vm196, %v192
    // Predicated region
    $region18: #{fn.1} parent=1 // pred_check
      %p198 = pneg %p26
    $region19: #{fn.1} parent=1 // pred_check_branch
      %200 = sbr.rel (%p198) target = $region21
    $region20: #{fn.1} parent=1 // pred_region
      %v201 = vld [vmem:[#allocation2] sm:$0x3]
      %v202 = vmul.f32 %v201, %v201
      %v204 = vrot.slane %v201, 1
      %v206 = vmul.f32 %v204, %v204
      %v207 = vadd.f32 %v202, %v206
      %208 = vst [vmem:[%s2] sm:$0x1] %v207
    $region21: #{fn.1} parent=1 // pred_fallthru
      _
    // Predicated region
    $region22: #{fn.1} parent=1 // pred_check
      _
    $region23: #{fn.1} parent=1 // pred_check_branch
      %210 = sbr.rel (0) target = $region25
    $region24: #{fn.1} parent=1 // pred_region
      _
    $region25: #{fn.1} parent=1 // pred_fallthru
      _
    // Predicated region
    $region26: #{fn.1} parent=1 // pred_check
      _
    $region27: #{fn.1} parent=1 // pred_check_branch
      %212 = sbr.rel (0) target = $region29
    $region28: #{fn.1} parent=1 // pred_region
      _
    $region29: #{fn.1} parent=1 // pred_fallthru
      _
    %213 = vsyncpa [#allocation4], 1

</llo_original>
